<compile_context>
chip_gen: v5e
topology: v5e:2x2
jax: 0.10.0
libtpu: 0.0.40
codegen_flags: <defaults>
</compile_context>

<pallas_src>
import jax
import jax.numpy as jnp
from jax import lax
from jax.experimental import pallas as pl
from jax.experimental.pallas import tpu as pltpu


def mlp_kernel(x_ref, w1T_ref, bw_ref, b2_ref, o_ref):
    # Layer 1 on the MXU, contracting D_in of both operands so x is consumed in its
    # natural (tile_b, D_in) layout:  (H, D_in) x (tile_b, D_in)^T -> (H, tile_b), f32 acc.
    h = lax.dot_general(
        w1T_ref[...], x_ref[...],
        dimension_numbers=(((1,), (1,)), ((), ())),
        preferred_element_type=jnp.float32)
    h = h + bw_ref[:, 0:1]          # b1 column broadcasts across the lane (batch) axis
    h = jnp.maximum(h, 0.0)         # ReLU on the VPU, kept f32 (v5e has no bf16 VPU)

    # Dropout: PyTorch eval-mode forward is the identity (no scaling applied).
    # TODO(synk): train-mode dropout would use pltpu.prng_seed + pltpu.stateful_bernoulli.

    # Layer 2 has out_features == 1: a (tile_b,H)x(H,1) MXU matmul would use one useful
    # MXU column + full FIFO latency, so use VPU multiply + sublane (XLU) reduce instead;
    # the result is naturally lane-major (1, tile_b).
    z = jnp.sum(h * bw_ref[:, 1:2], axis=0, keepdims=True)    # (1, tile_b)
    z = z + b2_ref[0]                                          # scalar bias from SMEM
    o_ref[...] = jax.nn.sigmoid(z).astype(o_ref.dtype)         # EUP sigmoid


def _pad(n, m):
    return -(-n // m) * m


def _vmem_estimate(D_in, H, tile_b, in_itemsize, out_itemsize):
    # Generous per-buffer padding to the (8,128) tile grid.
    w1 = _pad(H, 8) * _pad(D_in, 128) * in_itemsize             # single-buffered
    x = 2 * _pad(tile_b, 8) * _pad(D_in, 128) * in_itemsize     # double-buffered x tiles
    bw = _pad(H, 8) * 128 * 4                                   # (H,2) lane-pads to 128
    out = 2 * 8 * _pad(tile_b, 128) * out_itemsize              # (1,tile_b) sublane-pads to 8
    return w1 + x + bw + out


def _pick_tile_b(B):
    """Largest lane tile that divides B, is a multiple of 128 (or == B), and yields >=2
    grid steps when possible so v7x's two TensorCores both get work."""
    if B < 256 or B % 128 != 0:
        # TODO(synk): pad / ragged-handle batches that are large but not 128-divisible.
        return B
    limit = min(2048, B // 2)                 # 2048 cap: v6e measured plateau, v7x VMEM
    cand = (limit // 128) * 128
    while cand >= 128:
        if B % cand == 0:
            return cand
        cand -= 128
    return B


def mlp_forward(x, w1, b1, w2, b2, *, tile_b=None, use_bf16_matmul=False):
    """x: (B, D_in); w1: (D_in, H); b1: (H,); w2: (H, 1); b2: (1,). Returns (B, 1)."""
    B, D_in = x.shape
    H = w1.shape[1]
    out_dtype = x.dtype

    if tile_b is None:
        tile_b = _pick_tile_b(B)
    assert B % tile_b == 0 and (tile_b == B or tile_b % 128 == 0), (
        "tile_b must divide B and be a multiple of 128 (or equal B)")

    # Wrapper-side layout plumbing touches only the (tiny) weights, never x.
    w1T = jnp.transpose(w1)                                              # (H, D_in)
    bw = jnp.concatenate(
        [jnp.reshape(b1, (H, 1)), jnp.reshape(w2, (H, 1))], axis=1
    ).astype(jnp.float32)                                                # packed [b1 | w2]
    b2_s = jnp.reshape(b2, (1,)).astype(jnp.float32)                     # scalar -> SMEM

    in_dtype = x.dtype
    if use_bf16_matmul:
        # bf16 MXU inputs (valid on v5e/v6e/v7x — the MXU is bf16-native everywhere);
        # accumulation and all post-matmul elementwise stay f32 in-kernel.
        # TODO(synk): drop this astype (an extra HBM pass over x) if the producer emits bf16.
        x = x.astype(jnp.bfloat16)
        w1T = w1T.astype(jnp.bfloat16)
        in_dtype = jnp.bfloat16

    in_itemsize = jnp.dtype(in_dtype).itemsize
    out_itemsize = jnp.dtype(out_dtype).itemsize

    # VMEM budgeting (v7x has only 64 MiB physical): shrink the lane tile until the
    # resident-W1 + double-buffered-x footprint fits ~40 MiB, then set the scoped limit
    # explicitly with headroom (capped safely below v7x physical).
    budget = 40 << 20
    while (_vmem_estimate(D_in, H, tile_b, in_itemsize, out_itemsize) > budget
           and tile_b % 256 == 0 and B % (tile_b // 2) == 0):
        tile_b //= 2
    est = _vmem_estimate(D_in, H, tile_b, in_itemsize, out_itemsize)
    vmem_limit = int(min(max(est * 1.25 + (2 << 20), 16 << 20), 48 << 20))
    # TODO(synk): at real model sizes (D_in*H tens of MiB) add a D_in grid axis marked
    # "arbitrary" with an f32 accumulator scratch instead of keeping W1 fully resident.

    grid = (B // tile_b,)

    out = pl.pallas_call(
        mlp_kernel,
        out_shape=jax.ShapeDtypeStruct((1, B), out_dtype),
        grid_spec=pltpu.PrefetchScalarGridSpec(
            num_scalar_prefetch=0,
            grid=grid,
            in_specs=[
                # x streams in its natural (B, D_in) layout; batch tiles walk the grid.
                pl.BlockSpec((tile_b, D_in), lambda i: (i, 0)),
                # Grid-invariant operands: fetched once, single-buffered (no wasted copy).
                pl.BlockSpec((H, D_in), lambda i: (0, 0), pipeline_mode=pl.Buffered(1)),
                pl.BlockSpec((H, 2), lambda i: (0, 0), pipeline_mode=pl.Buffered(1)),
                pl.BlockSpec(memory_space=pltpu.MemorySpace.SMEM),   # b2 scalar
            ],
            out_specs=pl.BlockSpec((1, tile_b), lambda i: (0, i)),   # lane-dense output
        ),
        compiler_params=pltpu.CompilerParams(
            dimension_semantics=("parallel",),  # >=2 grid steps shard across v7x's 2 TCs
            vmem_limit_bytes=vmem_limit,
        ),
    )(x, w1T, bw, b2_s)

    return jnp.reshape(out, (B, 1))  # match nn.Linear(hidden_dim, 1) output shape


def init_params(key, input_dim, hidden_dim):
    # Deterministic synthetic init (roughly PyTorch's uniform(-1/sqrt(fan_in), 1/sqrt(fan_in))).
    k1, k2, k3, k4 = jax.random.split(key, 4)
    lim1 = 1.0 / (input_dim ** 0.5)
    lim2 = 1.0 / (hidden_dim ** 0.5)
    w1 = jax.random.uniform(k1, (input_dim, hidden_dim), jnp.float32, -lim1, lim1)
    b1 = jax.random.uniform(k2, (hidden_dim,), jnp.float32, -lim1, lim1)
    w2 = jax.random.uniform(k3, (hidden_dim, 1), jnp.float32, -lim2, lim2)
    b2 = jax.random.uniform(k4, (1,), jnp.float32, -lim2, lim2)
    return w1, b1, w2, b2


if __name__ == "__main__":
    key = jax.random.PRNGKey(0)
    kx, kp = jax.random.split(key)

    batch, input_dim, hidden_dim = 8, 16, 32
    x = jax.random.normal(kx, (batch, input_dim), jnp.float32)
    w1, b1, w2, b2 = init_params(kp, input_dim, hidden_dim)

    # Reference in plain JAX (eval-mode dropout = identity).
    ref = jax.nn.sigmoid(jnp.maximum(x @ w1 + b1, 0.0) @ w2 + b2)

    # f32 MXU path: tight tolerance.
    out = jax.block_until_ready(mlp_forward(x, w1, b1, w2, b2))
    assert out.shape == (batch, 1)
    assert jnp.allclose(out, ref, atol=1e-5), "f32 mismatch vs reference"

    # bf16 MXU-input path (valid on all generations): relaxed tolerance.
    out_bf16 = jax.block_until_ready(mlp_forward(x, w1, b1, w2, b2, use_bf16_matmul=True))
    assert out_bf16.shape == (batch, 1)
    assert jnp.allclose(out_bf16, ref, atol=2e-2), "bf16 mismatch vs reference"

    print("KERNEL_OK")
</pallas_src>

<mosaic_0001>
module attributes {stable_mosaic.version = 11 : i64} {
  func.func @mlp_kernel(%arg0: i32, %arg1: memref<8x16xf32, #tpu.memory_space<vmem>>, %arg2: memref<32x16xf32, #tpu.memory_space<vmem>>, %arg3: memref<32x2xf32, #tpu.memory_space<vmem>>, %arg4: memref<1xf32, #tpu.memory_space<smem>>, %arg5: memref<1x8xf32, #tpu.memory_space<vmem>>) attributes {dimension_semantics = [#tpu.dimension_semantics<parallel>], iteration_bounds = array<i64: 1>, scalar_prefetch = 0 : i64, scratch_operands = 0 : i64, tpu.core_type = #tpu.core_type<tc>, window_params = [{transform_indices = @transform_0, window_bounds = array<i64: 8, 16>}, {pipeline_mode = #tpu.pipeline_mode<synchronous>, transform_indices = @transform_1, window_bounds = array<i64: 32, 16>}, {pipeline_mode = #tpu.pipeline_mode<synchronous>, transform_indices = @transform_2, window_bounds = array<i64: 32, 2>}, {transform_indices = @transform_3, window_bounds = array<i64: 1>}, {transform_indices = @transform_4, window_bounds = array<i64: 1, 8>}]} {
    %c0 = arith.constant 0 : index
    %c0_0 = arith.constant 0 : index
    %0 = vector.load %arg2[%c0, %c0_0] : memref<32x16xf32, #tpu.memory_space<vmem>>, vector<32x16xf32>
    %c0_1 = arith.constant 0 : index
    %c0_2 = arith.constant 0 : index
    %1 = vector.load %arg1[%c0_1, %c0_2] : memref<8x16xf32, #tpu.memory_space<vmem>>, vector<8x16xf32>
    %cst = arith.constant dense<0.000000e+00> : vector<32x8xf32>
    %2 = tpu.matmul %0, %1, %cst {dimension_numbers = #tpu.dot_dimension_numbers<[1], [1], [0], [0], [0, 0, 1, 0], [], []>} : vector<32x16xf32>, vector<8x16xf32>, vector<32x8xf32> -> vector<32x8xf32>
    %c0_3 = arith.constant 0 : index
    %c0_4 = arith.constant 0 : index
    %3 = vector.load %arg3[%c0_3, %c0_4] : memref<32x2xf32, #tpu.memory_space<vmem>>, vector<32x1xf32>
    %4 = vector.broadcast %3 : vector<32x1xf32> to vector<32x8xf32>
    %5 = arith.addf %2, %4 : vector<32x8xf32>
    %cst_5 = arith.constant 0.000000e+00 : f32
    %6 = vector.broadcast %cst_5 : f32 to vector<32x8xf32>
    %7 = arith.maximumf %5, %6 : vector<32x8xf32>
    %c0_6 = arith.constant 0 : index
    %c1 = arith.constant 1 : index
    %8 = vector.load %arg3[%c0_6, %c1] : memref<32x2xf32, #tpu.memory_space<vmem>>, vector<32x1xf32>
    %9 = vector.broadcast %8 : vector<32x1xf32> to vector<32x8xf32>
    %10 = arith.mulf %7, %9 : vector<32x8xf32>
    %cst_7 = arith.constant dense<0.000000e+00> : vector<8xf32>
    %11 = vector.multi_reduction <add>, %10, %cst_7 [0] : vector<32x8xf32> to vector<8xf32>
    %12 = vector.shape_cast %11 : vector<8xf32> to vector<1x8xf32>
    %c0_8 = arith.constant 0 : index
    %13 = memref.load %arg4[%c0_8] : memref<1xf32, #tpu.memory_space<smem>>
    %14 = vector.broadcast %13 : f32 to vector<1x8xf32>
    %15 = arith.addf %12, %14 : vector<1x8xf32>
    %16 = arith.negf %15 : vector<1x8xf32>
    %17 = math.exp %16 : vector<1x8xf32>
    %cst_9 = arith.constant 1.000000e+00 : f32
    %18 = vector.broadcast %cst_9 : f32 to vector<1x8xf32>
    %19 = arith.addf %18, %17 : vector<1x8xf32>
    %20 = arith.divf %18, %19 : vector<1x8xf32>
    %c0_10 = arith.constant 0 : index
    %c0_11 = arith.constant 0 : index
    %21 = vector.load %arg5[%c0_10, %c0_11] : memref<1x8xf32, #tpu.memory_space<vmem>>, vector<1x8xf32>
    tpu.vector_store %arg5[%c0_10, %c0_11], %20 {strides = array<i32>} : memref<1x8xf32, #tpu.memory_space<vmem>>, vector<1x8xf32>,
    return
  }
  func.func @transform_0(%arg0: i32) -> (i32, i32) {
    %c0_i32 = arith.constant 0 : i32
    %c0_i32_0 = arith.constant 0 : i32
    return %arg0, %c0_i32 : i32, i32
  }
  func.func @transform_1(%arg0: i32) -> (i32, i32) {
    %c0_i32 = arith.constant 0 : i32
    %c0_i32_0 = arith.constant 0 : i32
    %c0_i32_1 = arith.constant 0 : i32
    return %c0_i32, %c0_i32_0 : i32, i32
  }
  func.func @transform_2(%arg0: i32) -> (i32, i32) {
    %c0_i32 = arith.constant 0 : i32
    %c0_i32_0 = arith.constant 0 : i32
    %c0_i32_1 = arith.constant 0 : i32
    return %c0_i32, %c0_i32_0 : i32, i32
  }
  func.func @transform_3(%arg0: i32) -> i32 {
    %c0_i32 = arith.constant 0 : i32
    %c0_i32_0 = arith.constant 0 : i32
    return %c0_i32 : i32
  }
  func.func @transform_4(%arg0: i32) -> (i32, i32) {
    %c0_i32 = arith.constant 0 : i32
    %c0_i32_0 = arith.constant 0 : i32
    return %c0_i32, %arg0 : i32, i32
  }
}

</mosaic_0001>

<llo_original>
// kernel: tpu_custom_call.1
$region0: #{tpu_custom_call.1}
  #allocation0 [shape = 'u32[]', space=smem, size = 0x4, offset = 0x4, fixed_abs, tag = 'smem constant byte address 0x4 - core index']
  #allocation1 [shape = 'u32[72,128]{1,0:T(1,128)}', space=vmem, size = 0x9000, scoped, tag = 'internal scratch']
  #allocation2 [shape = 'f32[1]{0:T(128)S(6)}', space=smem, size = 0x200, scoped, tag = 'scoped memory for tpu_custom_call.1']
  %s0 = inlined_call_operand.vmem [shape: f32[8,16], index: 0, kind: input, shape index: {}]
  %s1 = inlined_call_operand.vmem [shape: f32[32,16], index: 1, kind: input, shape index: {}]
  %s2 = inlined_call_operand.vmem [shape: f32[32,2], index: 2, kind: input, shape index: {}]
  %s3 = inlined_call_operand.<no memory space> [shape: f32[1], index: 3, kind: input, shape index: {}]
  %s4 = inlined_call_operand.hbm [shape: f32[1,8], index: 4, kind: output, shape index: {}]
  %s5 = sld [smem:[#allocation0]]
  $region26: #{tpu_custom_call.1} parent=0
    _
  %s7 = ssub.s32 1, %s5
  %s8 = scalar_select 0, %s7, %s5
  %9 = sst [smem:[#allocation2]] %s3
  $region1: #{tpu_custom_call.1} parent=0
    #allocation3 [shape = 'u8[512]{0}', space=vmem, size = 0x400, scoped, tag = 'output window, operand 0, single buffered']
    #allocation4 [shape = 's32[1]{0}', space=sflag, size = 0x4, scoped, tag = 'scoped memory for tpu_custom_call.1']
    %10 = vsyncpa [#allocation4], 0
    // Predicated region
    $region2: #{tpu_custom_call.1} parent=1 // pred_check
      _
    $region3: #{tpu_custom_call.1} parent=1 // pred_check_branch
      %12 = sbr.rel (0) target = $region5
    $region4: #{tpu_custom_call.1} parent=1 // pred_region
      _
    $region5: #{tpu_custom_call.1} parent=1 // pred_fallthru
      _
    // Predicated region
    $region6: #{tpu_custom_call.1} parent=1 // pred_check
      _
    $region7: #{tpu_custom_call.1} parent=1 // pred_check_branch
      %14 = sbr.rel (0) target = $region9
    $region8: #{tpu_custom_call.1} parent=1 // pred_region
      _
    $region9: #{tpu_custom_call.1} parent=1 // pred_fallthru
      _
    // Predicated region
    $region10: #{tpu_custom_call.1} parent=1 // pred_check
      _
    $region11: #{tpu_custom_call.1} parent=1 // pred_check_branch
      %16 = sbr.rel (0) target = $region13
    $region12: #{tpu_custom_call.1} parent=1 // pred_region
      _
    $region13: #{tpu_custom_call.1} parent=1 // pred_fallthru
      _
    // Predicated region
    $region14: #{tpu_custom_call.1} parent=1 // pred_check
      _
    $region15: #{tpu_custom_call.1} parent=1 // pred_check_branch
      %18 = sbr.rel (0) target = $region17
    $region16: #{tpu_custom_call.1} parent=1 // pred_region
      _
    $region17: #{tpu_custom_call.1} parent=1 // pred_fallthru
      _
    %v19 = vld [vmem:[%s1] sm:$0xff]
    %v20 = vld [vmem:[%s1 + $0x8] sm:$0xff]
    %v21 = vld [vmem:[%s1 + $0x10] sm:$0xff]
    %v22 = vld [vmem:[%s1 + $0x18] sm:$0xff]
    %v23 = vld [vmem:[%s0] sm:$0xff]
    %v24 = vld [vmem:[%s2] sm:$0xff]
    %v25 = vld [vmem:[%s2 + $0x8] sm:$0xff]
    %v26 = vld [vmem:[%s2 + $0x10] sm:$0xff]
    %v27 = vld [vmem:[%s2 + $0x18] sm:$0xff]
    %29 = vset.pattern.permute.xlu0 0
    %30 = vperm.xlu0 %29, %v24
    %v31 = vpop.permute.xlu0 %30
    %34 = vset.pattern.permute.xlu0 0
    %35 = vperm.xlu0 %34, %v25
    %v36 = vpop.permute.xlu0 %35
    %39 = vset.pattern.permute.xlu0 0
    %40 = vperm.xlu0 %39, %v26
    %v41 = vpop.permute.xlu0 %40
    %44 = vset.pattern.permute.xlu0 0
    %45 = vperm.xlu0 %44, %v27
    %v46 = vpop.permute.xlu0 %45
    %vm48 = vcmask 130048
    %v50 = vsel %vm48, %v19, 0
    %v53 = vsel %vm48, %v20, 0
    %v56 = vsel %vm48, %v21, 0
    %v59 = vsel %vm48, %v22, 0
    %v62 = vsel %vm48, %v23, 0
    %64 = vmatpush.xpose.msra.mxu0 0.0
    %65 = vmatpush.xpose.msra.mxu0 0.0
    %66 = vmatpush.xpose.msra.mxu0 0.0
    %67 = vmatpush.xpose.msra.mxu0 0.0
    %68 = vmatpush.xpose.msra.mxu0 0.0
    %69 = vmatpush.xpose.msra.mxu0 0.0
    %70 = vmatpush.xpose.msra.mxu0 0.0
    %71 = vmatpush.xpose.msra.mxu0 0.0
    %72 = vmatpush.xpose.msra.mxu0 0.0
    %73 = vmatpush.xpose.msra.mxu0 0.0
    %74 = vmatpush.xpose.msra.mxu0 0.0
    %75 = vmatpush.xpose.msra.mxu0 0.0
    %76 = vmatpush.xpose.msra.mxu0 0.0
    %77 = vmatpush.xpose.msra.mxu0 0.0
    %78 = vmatpush.xpose.msra.mxu0 0.0
    %79 = vmatpush.xpose.msra.mxu0 %v62
    %80 = vmatmul.f32.gmra.mxu0 %v50
    %v81 = vpop.f32.mrf.mxu0
    %v82 = vadd.f32 %v31, %v81
    %83 = vmatmul.f32.gmra.mxu0 %v53
    %v84 = vpop.f32.mrf.mxu0
    %v85 = vadd.f32 %v36, %v84
    %86 = vmatmul.f32.gmra.mxu0 %v56
    %v87 = vpop.f32.mrf.mxu0
    %v88 = vadd.f32 %v41, %v87
    %89 = vmatmul.f32.gmra.mxu0 %v59
    %v90 = vpop.f32.mrf.mxu0
    %v91 = vadd.f32 %v46, %v90
    %92 = vdwg.mxu0
    %v93 = vmax.f32 %v82, 0.0
    %v94 = vmax.f32 %v85, 0.0
    %v95 = vmax.f32 %v88, 0.0
    %v96 = vmax.f32 %v91, 0.0
    %97 = vset.pattern.permute.xlu0 1
    %98 = vperm.xlu0 %97, %v24
    %v99 = vpop.permute.xlu0 %98
    %101 = vset.pattern.permute.xlu0 1
    %102 = vperm.xlu0 %101, %v25
    %v103 = vpop.permute.xlu0 %102
    %105 = vset.pattern.permute.xlu0 1
    %106 = vperm.xlu0 %105, %v26
    %v107 = vpop.permute.xlu0 %106
    %109 = vset.pattern.permute.xlu0 1
    %110 = vperm.xlu0 %109, %v27
    %v111 = vpop.permute.xlu0 %110
    %v113 = vmul.f32 %v93, %v99
    %v114 = vmul.f32 %v94, %v103
    %v115 = vmul.f32 %v95, %v107
    %v116 = vmul.f32 %v96, %v111
    %vm117 = vcmask 64512
    %v118 = vsel %vm117, %v113, 0.0
    %v119 = vsel %vm117, %v114, 0.0
    %v120 = vadd.f32 %v118, %v119
    %v121 = vsel %vm117, %v115, 0.0
    %v122 = vadd.f32 %v120, %v121
    %v123 = vsel %vm117, %v116, 0.0
    %v124 = vadd.f32 %v122, %v123
    %v125 = vrot.slane %v124, 4
    %v126 = vadd.f32 %v124, %v125
    %v127 = vrot.slane %v126, 2
    %v128 = vadd.f32 %v126, %v127
    %v129 = vrot.slane %v128, 1
    %v130 = vadd.f32 %v128, %v129
    %s131 = sld [smem:[#allocation2]]
    %v132 = vstv %s131
    %v133 = vadd.f32 %v130, %v132
    %v134 = vxor.u32 %v133, 2147483648
    %v135 = vmul.f32 %v134, 1.442695
    %v136 = vpow.pop %v135
    %v137 = vadd.f32 %v136, 1.0
    %v138 = vrcp.pop %v137
    %v139 = vmul.f32 %v137, %v138
    %v140 = vsub.f32 1.0, %v139
    %v141 = vmul.f32 %v138, %v140
    %v142 = vadd.f32 %v138, %v141
    %vm143 = vweird.f32 %v137
    %vm144 = vweird.f32 %v138
    %vm145 = vmor %vm143, %vm144
    %v146 = vsel %vm145, %v138, %v142
    %v147 = vand.u32 2147483647, %v137
    %vm148 = vcmp.eq.f32.partialorder %v147, 8.507059e+37
    %v149 = vand.u32 %v137, 2147483648
    %v150 = vor.u32 1.1754944e-38, %v149
    %v151 = vsel %vm148, %v150, %v146
    %v152 = vmul.f32 1.0, %v151
    %vm153 = vcmask 57344
    %154 = vst.msk [vmem:[#allocation3] sm:$0x1] %vm153, %v152
    // Predicated region
    $region18: #{tpu_custom_call.1} parent=1 // pred_check
      _
    $region19: #{tpu_custom_call.1} parent=1 // pred_check_branch
      %156 = sbr.rel (0) target = $region21
    $region20: #{tpu_custom_call.1} parent=1 // pred_region
      %158 = vsyncadd [#allocation4], 0
      %s160 = sshll.u32 [#allocation3], 4
      %s161 = int_to_ptr.vmem [resolvable:$true] %s160
      %s162 = sshll.u32 %s4, 4
      %s163 = int_to_ptr.hbm [resolvable:$true] %s162
      %165 = dma.vmem_to_hbm [thread:$0]  %s161, 16, %s163, [#allocation4]
    $region21: #{tpu_custom_call.1} parent=1 // pred_fallthru
      _
    // Predicated region
    $region22: #{tpu_custom_call.1} parent=1 // pred_check
      _
    $region23: #{tpu_custom_call.1} parent=1 // pred_check_branch
      %167 = sbr.rel (0) target = $region25
    $region24: #{tpu_custom_call.1} parent=1 // pred_region
      %169 = dma.done [#allocation4], 16
    $region25: #{tpu_custom_call.1} parent=1 // pred_fallthru
      _
    %170 = vsyncpa [#allocation4], 1

</llo_original>
